<compile_context>
chip_gen: v6e
topology: v6e:2x2x1
jax: 0.10.0
libtpu: 0.0.40
codegen_flags: <defaults>
</compile_context>

<pallas_src>
import math
from functools import partial

import jax
import jax.numpy as jnp
import numpy as np
from jax.experimental import pallas as pl
from jax.experimental.pallas import tpu as pltpu


def _round_up(a, b):
    return ((a + b - 1) // b) * b


def _detect_vmem_capacity():
    # One-time capability detection (not a per-call broad except).
    try:
        return int(pltpu.get_tpu_info().vmem_capacity_bytes)
    except Exception:
        return 64 * 1024 * 1024  # conservative: v7x per-core VMEM

_VMEM_CAPACITY = _detect_vmem_capacity()


# ---------------------------------------------------------------------------
# Kernel: one fused matmul per (head-pair, token-tile) grid step + relu*linear
# ---------------------------------------------------------------------------
def mscffn_step1_kernel(x_ref, w_ref, b_ref, o_ref):
    # x_ref: (tn, D) already in matmul dtype; w_ref: (D, 2*I2); b_ref: (1, 2*I2)
    inter = jnp.dot(x_ref[...], w_ref[...],
                    preferred_element_type=jnp.float32)      # (tn, 2*I2) f32
    inter = inter + b_ref[...]
    i2 = inter.shape[-1] // 2
    # first I2 lanes = relu head j, last I2 lanes = linear head j+8
    gated = jnp.maximum(inter[:, :i2], 0.0) * inter[:, i2:]  # (tn, I2)
    o_ref[...] = gated.astype(o_ref.dtype)


# ---------------------------------------------------------------------------
# Offline parameter packing (called ONCE, outside the per-call path)
# ---------------------------------------------------------------------------
def pack_mscffn_step1_params(params, matmul_dtype=jnp.bfloat16):
    """Fold dense_ffn_head into the per-head projection, pairwise interleaved.

    Returns wp (8, D, 2*I2) and bp (8, 1, 2*I2) such that for pair j
      x @ wp[j] + bp[j] == [inter_head_j | inter_head_{j+8}]
    where inter_head_k is the module's per-head intermediate activation.
    """
    w1, b1 = params["w1"], params["b1"]            # (D, D) (in,out), (D,)
    wi, bi = params["wi"], params["bi"]            # (16, hs, I2), (16, I2)
    D = w1.shape[0]
    H, hs, I2 = wi.shape
    assert D == H * hs and H == 16
    wa = jnp.einsum("dhk,hki->hdi", w1.reshape(D, H, hs), wi)      # (16, D, I2)
    ba = jnp.einsum("hk,hki->hi", b1.reshape(H, hs), wi) + bi      # (16, I2)
    hp = H // 2
    wp = jnp.concatenate([wa[:hp], wa[hp:]], axis=-1)              # (8, D, 2*I2)
    bp = jnp.concatenate([ba[:hp], ba[hp:]], axis=-1)[:, None, :]  # (8, 1, 2*I2)
    return {"wp": wp.astype(matmul_dtype), "bp": bp.astype(jnp.float32)}


# ---------------------------------------------------------------------------
# Jitted wrapper
# ---------------------------------------------------------------------------
@partial(jax.jit, static_argnames=("tn", "out_dtype"))
def mscffn_step1_pallas(x, packed, tn=512, out_dtype=None):
    """x: (B, L, D) -> (8, B*L, I2), matching MSCFFN_step1.forward.

    out_dtype defaults to x.dtype; pass jnp.bfloat16 if the consumer (step2)
    accepts bf16 to halve the dominant output HBM write traffic.
    """
    B, L, D = x.shape
    N = B * L
    wp, bp = packed["wp"], packed["bp"]
    n_pairs, Dw, two_i2 = wp.shape
    I2 = two_i2 // 2
    assert Dw == D, "packed weights do not match hidden size"
    odt = jnp.dtype(x.dtype) if out_dtype is None else jnp.dtype(out_dtype)

    # Large token tile for the MXU M-dim; clamp for small N, pad to a multiple.
    tn = _round_up(min(int(tn), _round_up(N, 8)), 8)
    N_pad = _round_up(N, tn)

    # Cast to matmul dtype in the wrapper (fuses with the pad under jit) so the
    # x DMA moves bf16 bytes and no per-tile convert runs on the VPU.
    xf = x.reshape(N, D).astype(wp.dtype)
    if N_pad != N:
        xf = jnp.pad(xf, ((0, N_pad - N), (0, 0)))

    xb = jnp.dtype(wp.dtype).itemsize
    ob = odt.itemsize
    # Real per-step footprint: double-buffered x / weight / bias / out tiles
    # + f32 intermediate + headroom; clamp to ~80% of physical VMEM.
    need = (2 * tn * D * xb            # x tile double buffer
            + 2 * D * two_i2 * xb      # weight slab double buffer
            + 2 * two_i2 * 4           # bias double buffer
            + 2 * tn * I2 * ob         # out tile double buffer
            + tn * two_i2 * 4          # f32 intermediate
            + (2 << 20))               # headroom
    vmem_limit = max(32 * 1024 * 1024, min(need, int(0.8 * _VMEM_CAPACITY)))

    cost = pl.CostEstimate(
        flops=2 * N_pad * D * n_pairs * two_i2 + 2 * N_pad * n_pairs * I2,
        transcendentals=0,
        bytes_accessed=(n_pairs * N_pad * D * xb          # x re-read per column block
                        + wp.size * xb + bp.size * 4
                        + n_pairs * N_pad * I2 * ob),
    )

    out = pl.pallas_call(
        mscffn_step1_kernel,
        out_shape=jax.ShapeDtypeStruct((n_pairs, N_pad, I2), odt),
        grid=(n_pairs, N_pad // tn),      # column/head-pair OUTER, tokens INNER
        in_specs=[
            pl.BlockSpec((tn, D), lambda j, i: (i, 0)),          # x token tile
            pl.BlockSpec((None, D, two_i2), lambda j, i: (j, 0, 0)),   # pair weights
            pl.BlockSpec((None, 1, two_i2), lambda j, i: (j, 0, 0)),   # pair bias
        ],
        out_specs=pl.BlockSpec((None, tn, I2), lambda j, i: (j, i, 0)),  # head-major
        compiler_params=pltpu.CompilerParams(
            dimension_semantics=("parallel", "parallel"),
            vmem_limit_bytes=vmem_limit,
        ),
        cost_estimate=cost,
    )(xf, wp, bp)

    return out[:, :N, :]                   # drop zero-padded token rows


# ---------------------------------------------------------------------------
# Pure-JAX reference (mirrors the PyTorch MSCFFN_step1 semantics)
# ---------------------------------------------------------------------------
def mscffn_step1_ref(x, params):
    B, L, D = x.shape
    H = 16
    hs = D // H
    h = x @ params["w1"] + params["b1"]                               # dense_ffn_head
    h = h.reshape(B * L, H, hs).transpose(1, 0, 2)                    # (16, N, hs)
    inter = jnp.einsum("hnk,hki->hni", h, params["wi"]) + params["bi"][:, None, :]
    return jax.nn.relu(inter[:H // 2]) * inter[H // 2:]               # (8, N, I2)


# ---------------------------------------------------------------------------
# Deterministic synthetic parameters (same shapes as the module)
# ---------------------------------------------------------------------------
def make_params(key, hidden_size, intermediate_dim):
    D = hidden_size
    H = 16
    hs = D // H
    I2 = intermediate_dim * 2

    def kaiming_uniform(k, shape, fan_in):
        bound = math.sqrt(6.0 / fan_in)
        return jax.random.uniform(k, shape, jnp.float32, -bound, bound)

    k1, k2, k3 = jax.random.split(key, 3)
    return {
        # dense_ffn_head, stored (in, out) so y = x @ w1 + b1
        "w1": kaiming_uniform(k1, (D, D), D),
        "b1": kaiming_uniform(k2, (D,), D) / math.sqrt(3.0),
        # ffn_intermediate_weights / ffn_intermediate_bias (bias zero-init)
        "wi": kaiming_uniform(k3, (H, hs, I2), hs * I2),
        "bi": jnp.zeros((H, I2), jnp.float32),
    }


if __name__ == "__main__":
    B, L = 2, 8
    hidden_size, intermediate_dim = 64, 32        # D=64 -> head_size=4, I2=64

    key = jax.random.PRNGKey(0)
    kx, kx2, kp = jax.random.split(key, 3)
    x = jax.random.normal(kx, (B, L, hidden_size), jnp.float32)
    params = make_params(kp, hidden_size, intermediate_dim)

    ref = jax.block_until_ready(mscffn_step1_ref(x, params))

    # f32 matmul path: tight check of the fused-weight / pair-packing algebra.
    packed_f32 = pack_mscffn_step1_params(params, matmul_dtype=jnp.float32)
    out_f32 = jax.block_until_ready(mscffn_step1_pallas(x, packed_f32, tn=512))
    np.testing.assert_allclose(np.asarray(out_f32), np.asarray(ref),
                               rtol=1e-4, atol=1e-4)

    # bf16 matmul path (performance default: halves weight/activation DMA).
    packed_bf16 = pack_mscffn_step1_params(params, matmul_dtype=jnp.bfloat16)
    out_bf16 = jax.block_until_ready(mscffn_step1_pallas(x, packed_bf16, tn=512))
    np.testing.assert_allclose(np.asarray(out_bf16), np.asarray(ref),
                               rtol=2e-2, atol=2e-2)

    # Multi token-tile + row-padding path (grid = (8, 3), 42 padded rows dropped).
    x2 = jax.random.normal(kx2, (3, 50, hidden_size), jnp.float32)
    ref2 = jax.block_until_ready(mscffn_step1_ref(x2, params))
    out2 = jax.block_until_ready(mscffn_step1_pallas(x2, packed_f32, tn=64))
    np.testing.assert_allclose(np.asarray(out2), np.asarray(ref2),
                               rtol=1e-4, atol=1e-4)

    print("KERNEL_OK")
</pallas_src>

<mosaic_0001>
module attributes {stable_mosaic.version = 11 : i64} {
  func.func @mscffn_step1_kernel(%arg0: i32, %arg1: i32, %arg2: memref<16x64xf32, #tpu.memory_space<vmem>>, %arg3: memref<1x64x128xf32, #tpu.memory_space<vmem>>, %arg4: memref<1x1x128xf32, #tpu.memory_space<vmem>>, %arg5: memref<1x16x64xf32, #tpu.memory_space<vmem>>) attributes {dimension_semantics = [#tpu.dimension_semantics<parallel>, #tpu.dimension_semantics<parallel>], iteration_bounds = array<i64: 8, 1>, scalar_prefetch = 0 : i64, scratch_operands = 0 : i64, tpu.core_type = #tpu.core_type<tc>, window_params = [{transform_indices = @transform_0, window_bounds = array<i64: 16, 64>}, {transform_indices = @transform_1, window_bounds = array<i64: 1, 64, 128>}, {transform_indices = @transform_2, window_bounds = array<i64: 1, 1, 128>}, {transform_indices = @transform_3, window_bounds = array<i64: 1, 16, 64>}]} {
    %c0 = arith.constant 0 : index
    %c0_0 = arith.constant 0 : index
    %0 = vector.load %arg2[%c0, %c0_0] : memref<16x64xf32, #tpu.memory_space<vmem>>, vector<16x64xf32>
    %c0_1 = arith.constant 0 : index
    %c0_2 = arith.constant 0 : index
    %c0_3 = arith.constant 0 : index
    %1 = vector.load %arg3[%c0_1, %c0_2, %c0_3] : memref<1x64x128xf32, #tpu.memory_space<vmem>>, vector<1x64x128xf32>
    %2 = vector.shape_cast %1 : vector<1x64x128xf32> to vector<64x128xf32>
    %cst = arith.constant dense<0.000000e+00> : vector<16x128xf32>
    %3 = tpu.matmul %0, %2, %cst {dimension_numbers = #tpu.dot_dimension_numbers<[1], [0], [0], [1], [0, 0, 1, 1], [], []>} : vector<16x64xf32>, vector<64x128xf32>, vector<16x128xf32> -> vector<16x128xf32>
    %c0_4 = arith.constant 0 : index
    %c0_5 = arith.constant 0 : index
    %c0_6 = arith.constant 0 : index
    %4 = vector.load %arg4[%c0_4, %c0_5, %c0_6] : memref<1x1x128xf32, #tpu.memory_space<vmem>>, vector<1x1x128xf32>
    %5 = vector.shape_cast %4 : vector<1x1x128xf32> to vector<1x128xf32>
    %6 = vector.broadcast %5 : vector<1x128xf32> to vector<16x128xf32>
    %7 = arith.addf %3, %6 : vector<16x128xf32>
    %8 = vector.extract_strided_slice %7 {offsets = [0, 0], sizes = [16, 64], strides = [1, 1]} : vector<16x128xf32> to vector<16x64xf32>
    %cst_7 = arith.constant 0.000000e+00 : f32
    %9 = vector.broadcast %cst_7 : f32 to vector<16x64xf32>
    %10 = arith.maximumf %8, %9 : vector<16x64xf32>
    %11 = vector.extract_strided_slice %7 {offsets = [0, 64], sizes = [16, 64], strides = [1, 1]} : vector<16x128xf32> to vector<16x64xf32>
    %12 = arith.mulf %10, %11 : vector<16x64xf32>
    %c0_8 = arith.constant 0 : index
    %c0_9 = arith.constant 0 : index
    %c0_10 = arith.constant 0 : index
    %13 = vector.load %arg5[%c0_8, %c0_9, %c0_10] : memref<1x16x64xf32, #tpu.memory_space<vmem>>, vector<1x16x64xf32>
    %14 = vector.shape_cast %13 : vector<1x16x64xf32> to vector<16x64xf32>
    %15 = vector.shape_cast %12 : vector<16x64xf32> to vector<1x16x64xf32>
    tpu.vector_store %arg5[%c0_8, %c0_9, %c0_10], %15 {strides = array<i32>} : memref<1x16x64xf32, #tpu.memory_space<vmem>>, vector<1x16x64xf32>,
    return
  }
  func.func @transform_0(%arg0: i32, %arg1: i32) -> (i32, i32) {
    %c0_i32 = arith.constant 0 : i32
    %c0_i32_0 = arith.constant 0 : i32
    return %arg1, %c0_i32 : i32, i32
  }
  func.func @transform_1(%arg0: i32, %arg1: i32) -> (i32, i32, i32) {
    %c0_i32 = arith.constant 0 : i32
    %c0_i32_0 = arith.constant 0 : i32
    %c0_i32_1 = arith.constant 0 : i32
    return %arg0, %c0_i32, %c0_i32_0 : i32, i32, i32
  }
  func.func @transform_2(%arg0: i32, %arg1: i32) -> (i32, i32, i32) {
    %c0_i32 = arith.constant 0 : i32
    %c0_i32_0 = arith.constant 0 : i32
    %c0_i32_1 = arith.constant 0 : i32
    return %arg0, %c0_i32, %c0_i32_0 : i32, i32, i32
  }
  func.func @transform_3(%arg0: i32, %arg1: i32) -> (i32, i32, i32) {
    %c0_i32 = arith.constant 0 : i32
    %c0_i32_0 = arith.constant 0 : i32
    return %arg0, %arg1, %c0_i32 : i32, i32, i32
  }
}

</mosaic_0001>

<llo_original>
// kernel: mscffn_step1_pallas.1
$region0: #{mscffn_step1_pallas.1}
  #allocation0 [shape = 'u32[]', space=smem, size = 0x4, offset = 0x4, fixed_abs, tag = 'smem constant byte address 0x4 - core index']
  #allocation1 [shape = 'u32[144,128]{1,0:T(1,128)}', space=vmem, size = 0x12000, scoped, tag = 'internal scratch']
  %s0 = inlined_call_operand.hbm [shape: f32[16,64], index: 0, kind: input, shape index: {}]
  %s1 = inlined_call_operand.hbm [shape: f32[8,64,128], index: 1, kind: input, shape index: {}]
  %s2 = inlined_call_operand.hbm [shape: f32[8,1,128], index: 2, kind: input, shape index: {}]
  %s3 = inlined_call_operand.hbm [shape: f32[8,16,64], index: 3, kind: output, shape index: {}]
  %s4 = sld [smem:[#allocation0]]
  $region57: #{mscffn_step1_pallas.1} parent=0
    _
  %s6 = ssub.s32 1, %s4
  %s7 = scalar_select 0, %s6, %s4
  $region1: #{mscffn_step1_pallas.1} parent=0
    #allocation2 [shape = 'u8[8192]{0}', space=vmem, size = 0x2000, scoped, tag = 'input window, operand 0, single buffered']
    #allocation3 [shape = 's32[2]{0}', space=sflag, size = 0x8, scoped, tag = 'scoped memory for mscffn_step1_pallas.1']
    #allocation4 [shape = 's32[2]{0}', space=sflag, size = 0x8, scoped, tag = 'scoped memory for mscffn_step1_pallas.1']
    #allocation5 [shape = 'u8[65536]{0}', space=vmem, size = 0x10000, scoped, tag = 'input window, operand 1']
    #allocation6 [shape = 's32[2]{0}', space=sflag, size = 0x8, scoped, tag = 'scoped memory for mscffn_step1_pallas.1']
    #allocation7 [shape = 'u8[1024]{0}', space=vmem, size = 0x400, scoped, tag = 'input window, operand 2']
    #allocation8 [shape = 'u8[16384]{0}', space=vmem, size = 0x4000, scoped, tag = 'output window, operand 0']
    %8 = vsyncpa [#allocation3], 0
    %9 = vsyncpa [#allocation6], 0
    %s10 = scalar_lea.sflag [#allocation6], 1
    %11 = vsyncpa %s10, 0
    %12 = vsyncpa [#allocation4], 0
    %s13 = scalar_lea.sflag [#allocation4], 1
    %14 = vsyncpa %s13, 0
    loop: start=0, step=1, limit=10
    $region2: #{mscffn_step1_pallas.1} parent=1 // loop_pre_header
      _
    $region3: #{mscffn_step1_pallas.1} parent=1 // loop_header
      %s16 = sphi 0, %s20
      %p17 = scmp.ge.s32.totalorder %s16, 10
      %s23 = sphi 0, %s35
      %s24 = sphi 0, %s31
      %s25 = sphi 0, %s23
      %s26 = sphi 0, %s24
      %s27 = sphi 0, %s25
      %s28 = sphi 0, %s26
      %s38 = sphi 0, %s40
      %s41 = sphi 0, %s38
      %s42 = sphi 0, %s41
      %s58 = sphi 0, %s42
      %s64 = sphi 0, %s66
      %s67 = sphi 0, %s64
      %s68 = sphi 0, %s67
      %s84 = sphi 0, %s68
      %s90 = sphi 0, %s92
      %s93 = sphi 0, %s90
      %s94 = sphi 0, %s93
      %s110 = sphi 0, %s94
      %s118 = sphi 0, %s120
      %s121 = sphi 0, %s118
      %s122 = sphi 0, %s121
      %s138 = sphi 0, %s122
    $region4: #{mscffn_step1_pallas.1} parent=1 // loop_header_branch
      %19 = sbr.rel (%p17) target = $region8
    $region5: #{mscffn_step1_pallas.1} parent=1 // loop_body
      %s21 = ssub.s32 %s16, 1
      %s22 = ssub.s32 %s16, 2
      %s29 = sadd.s32 1, %s24
      %p30 = scmp.ge.s32.totalorder %s29, 1
      %s31 = scalar_select %p30, 0, %s29
      %s32 = sadd.s32 1, %s23
      %s33 = scalar_select %p30, %s32, %s23
      %p34 = scmp.ge.s32.totalorder %s33, 8
      %s35 = scalar_select %p34, 0, %s33
      %s36 = ssub.s32 %s24, %s31
      %p37 = scmp.eq.s32.totalorder %s36, 0
      %s39 = sadd.s32 %s38, 1
      %s40 = scalar_select %p37, %s38, %s39
      %p43 = pneg %p37
      %p44 = scmp.eq.s32.totalorder %s16, 7
      %p45 = por %p43, %p44
      %p46 = scmp.ne.s32.totalorder %s38, %s41
      %p47 = scmp.eq.s32.totalorder %s16, 0
      %p48 = por %p46, %p47
      %p49 = scmp.ne.s32.totalorder %s38, %s41
      %p50 = scmp.eq.s32.totalorder %s21, 7
      %p51 = por %p49, %p50
      %p52 = scmp.ne.s32.totalorder %s41, %s42
      %p53 = scmp.eq.s32.totalorder %s21, 0
      %p54 = por %p52, %p53
      %p55 = scmp.ne.s32.totalorder %s41, %s42
      %p56 = scmp.eq.s32.totalorder %s22, 7
      %p57 = por %p55, %p56
      %p59 = scmp.ne.s32.totalorder %s42, %s58
      %p60 = scmp.eq.s32.totalorder %s22, 0
      %p61 = por %p59, %p60
      %s62 = ssub.s32 %s23, %s35
      %p63 = scmp.eq.s32.totalorder %s62, 0
      %s65 = sadd.s32 %s64, 1
      %s66 = scalar_select %p63, %s64, %s65
      %p69 = pneg %p63
      %p70 = scmp.eq.s32.totalorder %s16, 7
      %p71 = por %p69, %p70
      %p72 = scmp.ne.s32.totalorder %s64, %s67
      %p73 = scmp.eq.s32.totalorder %s16, 0
      %p74 = por %p72, %p73
      %p75 = scmp.ne.s32.totalorder %s64, %s67
      %p76 = scmp.eq.s32.totalorder %s21, 7
      %p77 = por %p75, %p76
      %p78 = scmp.ne.s32.totalorder %s67, %s68
      %p79 = scmp.eq.s32.totalorder %s21, 0
      %p80 = por %p78, %p79
      %p81 = scmp.ne.s32.totalorder %s67, %s68
      %p82 = scmp.eq.s32.totalorder %s22, 7
      %p83 = por %p81, %p82
      %p85 = scmp.ne.s32.totalorder %s68, %s84
      %p86 = scmp.eq.s32.totalorder %s22, 0
      %p87 = por %p85, %p86
      %s88 = ssub.s32 %s23, %s35
      %p89 = scmp.eq.s32.totalorder %s88, 0
      %s91 = sadd.s32 %s90, 1
      %s92 = scalar_select %p89, %s90, %s91
      %p95 = pneg %p89
      %p96 = scmp.eq.s32.totalorder %s16, 7
      %p97 = por %p95, %p96
      %p98 = scmp.ne.s32.totalorder %s90, %s93
      %p99 = scmp.eq.s32.totalorder %s16, 0
      %p100 = por %p98, %p99
      %p101 = scmp.ne.s32.totalorder %s90, %s93
      %p102 = scmp.eq.s32.totalorder %s21, 7
      %p103 = por %p101, %p102
      %p104 = scmp.ne.s32.totalorder %s93, %s94
      %p105 = scmp.eq.s32.totalorder %s21, 0
      %p106 = por %p104, %p105
      %p107 = scmp.ne.s32.totalorder %s93, %s94
      %p108 = scmp.eq.s32.totalorder %s22, 7
      %p109 = por %p107, %p108
      %p111 = scmp.ne.s32.totalorder %s94, %s110
      %p112 = scmp.eq.s32.totalorder %s22, 0
      %p113 = por %p111, %p112
      %s114 = ssub.s32 %s23, %s35
      %s115 = ssub.s32 %s24, %s31
      %s116 = sor.u32 %s114, %s115
      %p117 = scmp.eq.s32.totalorder %s116, 0
      %s119 = sadd.s32 %s118, 1
      %s120 = scalar_select %p117, %s118, %s119
      %p123 = pneg %p117
      %p124 = scmp.eq.s32.totalorder %s16, 7
      %p125 = por %p123, %p124
      %p126 = scmp.ne.s32.totalorder %s118, %s121
      %p127 = scmp.eq.s32.totalorder %s16, 0
      %p128 = por %p126, %p127
      %p129 = scmp.ne.s32.totalorder %s118, %s121
      %p130 = scmp.eq.s32.totalorder %s21, 7
      %p131 = por %p129, %p130
      %p132 = scmp.ne.s32.totalorder %s121, %s122
      %p133 = scmp.eq.s32.totalorder %s21, 0
      %p134 = por %p132, %p133
      %p135 = scmp.ne.s32.totalorder %s121, %s122
      %p136 = scmp.eq.s32.totalorder %s22, 7
      %p137 = por %p135, %p136
      %p139 = scmp.ne.s32.totalorder %s122, %s138
      %p140 = scmp.eq.s32.totalorder %s22, 0
      %p141 = por %p139, %p140
      %p142 = scmp.le.s32.totalorder 1, %s16
      %p143 = scmp.lt.s32.totalorder %s16, 9
      %p144 = pnand %p142, %p143
      %p145 = pneg %p144
      // Predicated region
      $region9: #{mscffn_step1_pallas.1} parent=5 // pred_check
        _
      $region10: #{mscffn_step1_pallas.1} parent=5 // pred_check_branch
        %147 = sbr.rel (%p144) target = $region12
      $region11: #{mscffn_step1_pallas.1} parent=5 // pred_region
        %s148 = ssub.s32 %s16, 1
        // Predicated region
        $region13: #{mscffn_step1_pallas.1} parent=11 // pred_check
          %p149 = pneg %p54
        $region14: #{mscffn_step1_pallas.1} parent=11 // pred_check_branch
          %151 = sbr.rel (%p149) target = $region16
        $region15: #{mscffn_step1_pallas.1} parent=11 // pred_region
          %s152 = smul.u32 2, %s26
          %s154 = ssub.s32 256, 256
          %155 = vsyncadd [#allocation3], %s154
          %s156 = smul.addr %s152, 128
          %s157 = scalar_lea.hbm %s0, %s156
          %s158 = sshll.u32 [#allocation2], 4
          %s159 = int_to_ptr.vmem [resolvable:$true] %s158
          %164 = dma.hbm_to_vmem [thread:$0]  %s157, 256, %s159, [#allocation3], 128, 128, 8
        $region16: #{mscffn_step1_pallas.1} parent=11 // pred_fallthru
          _
      $region12: #{mscffn_step1_pallas.1} parent=5 // pred_fallthru
        _
      %p165 = scmp.lt.s32.totalorder %s16, 8
      // Predicated region
      $region17: #{mscffn_step1_pallas.1} parent=5 // pred_check
        %p166 = pneg %p165
      $region18: #{mscffn_step1_pallas.1} parent=5 // pred_check_branch
        %168 = sbr.rel (%p166) target = $region20
      $region19: #{mscffn_step1_pallas.1} parent=5 // pred_region
        // Predicated region
        $region21: #{mscffn_step1_pallas.1} parent=19 // pred_check
          %p169 = pneg %p74
        $region22: #{mscffn_step1_pallas.1} parent=19 // pred_check_branch
          %171 = sbr.rel (%p169) target = $region24
        $region23: #{mscffn_step1_pallas.1} parent=19 // pred_region
          %s172 = sand.u32 %s16, 1
          %s173 = scalar_lea.sflag [#allocation6], %s172
          %s174 = sand.u32 %s64, 1
          %s175 = smul.addr %s174, 64
          %s176 = scalar_lea.vmem [#allocation5], %s175
          %s178 = ssub.s32 1024, 1024
          %179 = vsyncadd %s173, %s178
          %s180 = smul.addr %s23, 8
          %s181 = smul.addr %s180, 128
          %s182 = scalar_lea.hbm %s1, %s181
          %s183 = sshll.u32 %s176, 4
          %s184 = int_to_ptr.vmem [resolvable:$true] %s183
          %189 = dma.hbm_to_vmem [thread:$0]  %s182, 1024, %s184, %s173, 128, 128, 8
        $region24: #{mscffn_step1_pallas.1} parent=19 // pred_fallthru
          _
        // Predicated region
        $region25: #{mscffn_step1_pallas.1} parent=19 // pred_check
          %p190 = pneg %p100
        $region26: #{mscffn_step1_pallas.1} parent=19 // pred_check_branch
          %192 = sbr.rel (%p190) target = $region28
        $region27: #{mscffn_step1_pallas.1} parent=19 // pred_region
          %s193 = sand.u32 %s16, 1
          %s194 = scalar_lea.sflag [#allocation6], %s193
          %s195 = sand.u32 %s90, 1
          %s196 = scalar_lea.vmem [#allocation7], %s195
          %s198 = ssub.s32 16, 16
          %199 = vsyncadd %s194, %s198
          %s200 = smul.addr %s23, 16
          %s201 = scalar_lea.hbm %s2, %s200
          %s203 = sshll.u32 %s196, 4
          %s204 = int_to_ptr.vmem [resolvable:$true] %s203
          %206 = dma.hbm_to_vmem [thread:$0]  %s201, 16, %s204, %s194
        $region28: #{mscffn_step1_pallas.1} parent=19 // pred_fallthru
          _
      $region20: #{mscffn_step1_pallas.1} parent=5 // pred_fallthru
        _
      %p207 = scmp.le.s32.totalorder 1, %s16
      %p208 = scmp.lt.s32.totalorder %s16, 9
      %p209 = pnand %p207, %p208
      %p210 = pneg %p209
      // Predicated region
      $region29: #{mscffn_step1_pallas.1} parent=5 // pred_check
        _
      $region30: #{mscffn_step1_pallas.1} parent=5 // pred_check_branch
        %212 = sbr.rel (%p209) target = $region32
      $region31: #{mscffn_step1_pallas.1} parent=5 // pred_region
        %s213 = ssub.s32 %s16, 1
        // Predicated region
        $region33: #{mscffn_step1_pallas.1} parent=31 // pred_check
          %p214 = pneg %p54
        $region34: #{mscffn_step1_pallas.1} parent=31 // pred_check_branch
          %216 = sbr.rel (%p214) target = $region36
        $region35: #{mscffn_step1_pallas.1} parent=31 // pred_region
          %217 = dma.done [#allocation3], 256
        $region36: #{mscffn_step1_pallas.1} parent=31 // pred_fallthru
          _
        %s218 = sand.u32 %s21, 1
        %s219 = scalar_lea.sflag [#allocation6], %s218
        %s220 = sand.u32 %s67, 1
        %s221 = smul.addr %s220, 64
        %s222 = scalar_lea.vmem [#allocation5], %s221
        // Predicated region
        $region37: #{mscffn_step1_pallas.1} parent=31 // pred_check
          %p223 = pneg %p80
        $region38: #{mscffn_step1_pallas.1} parent=31 // pred_check_branch
          %225 = sbr.rel (%p223) target = $region40
        $region39: #{mscffn_step1_pallas.1} parent=31 // pred_region
          %226 = dma.done %s219, 1024
        $region40: #{mscffn_step1_pallas.1} parent=31 // pred_fallthru
          _
        %s227 = sand.u32 %s21, 1
        %s228 = scalar_lea.sflag [#allocation6], %s227
        %s229 = sand.u32 %s93, 1
        %s230 = scalar_lea.vmem [#allocation7], %s229
        // Predicated region
        $region41: #{mscffn_step1_pallas.1} parent=31 // pred_check
          %p231 = pneg %p106
        $region42: #{mscffn_step1_pallas.1} parent=31 // pred_check_branch
          %233 = sbr.rel (%p231) target = $region44
        $region43: #{mscffn_step1_pallas.1} parent=31 // pred_region
          %234 = dma.done %s228, 16
        $region44: #{mscffn_step1_pallas.1} parent=31 // pred_fallthru
          _
        %p235 = pneg %p54
        %p236 = pneg %p51
        %s237 = sand.u32 %s21, 1
        %s238 = scalar_lea.sflag [#allocation6], %s237
        %s239 = sand.u32 %s67, 1
        %s240 = smul.addr %s239, 64
        %s241 = scalar_lea.vmem [#allocation5], %s240
        %p242 = pneg %p80
        %p243 = pneg %p77
        %s244 = sand.u32 %s21, 1
        %s245 = scalar_lea.sflag [#allocation6], %s244
        %s246 = sand.u32 %s93, 1
        %s247 = scalar_lea.vmem [#allocation7], %s246
        %p248 = pneg %p106
        %p249 = pneg %p103
        %p250 = pneg %p134
        %p251 = pneg %p131
        %s252 = sand.u32 %s121, 1
        %s253 = scalar_lea.sflag [#allocation4], %s252
        %s254 = sand.u32 %s121, 1
        %s255 = smul.addr %s254, 16
        %s256 = scalar_lea.vmem [#allocation8], %s255
        %s257 = smul.u32 2, %s26
        %s258 = smul.u32 2, %s26
        %v259 = vld [vmem:[#allocation2] sm:$0xff]
        %v260 = vld [vmem:[#allocation2 + $0x8] sm:$0xff]
        %v261 = vld [vmem:[%s222] sm:$0xff]
        %v262 = vld [vmem:[%s222 + $0x8] sm:$0xff]
        %v263 = vld [vmem:[%s222 + $0x10] sm:$0xff]
        %v264 = vld [vmem:[%s222 + $0x18] sm:$0xff]
        %v265 = vld [vmem:[%s222 + $0x20] sm:$0xff]
        %v266 = vld [vmem:[%s222 + $0x28] sm:$0xff]
        %v267 = vld [vmem:[%s222 + $0x30] sm:$0xff]
        %v268 = vld [vmem:[%s222 + $0x38] sm:$0xff]
        %v269 = vld [vmem:[%s230] sm:$0x1]
        %v271 = vlaneseq
        %v272 = vshrl.u32 %v271, 7
        %v273 = vsub.s32 0, %v272
        %v274 = vrot.slane %v269, %v273
        %vm276 = vcmask 523264
        %v278 = vsel %vm276, %v259, 0
        %v281 = vsel %vm276, %v260, 0
        %283 = vmatprep.subr.mxu0 0.0
        %284 = vmatpush1.msra.mxu0 0.0
        %285 = vmatprep.subr.mxu0 0.0
        %286 = vmatpush1.msra.mxu0 0.0
        %287 = vmatprep.subr.mxu0 0.0
        %288 = vmatpush1.msra.mxu0 0.0
        %289 = vmatprep.subr.mxu0 0.0
        %290 = vmatpush1.msra.mxu0 0.0
        %291 = vmatprep.subr.mxu0 0.0
        %292 = vmatpush1.msra.mxu0 0.0
        %293 = vmatprep.subr.mxu0 0.0
        %294 = vmatpush1.msra.mxu0 0.0
        %295 = vmatprep.subr.mxu0 0.0
        %296 = vmatpush1.msra.mxu0 0.0
        %297 = vmatprep.subr.mxu0 0.0
        %298 = vmatpush1.msra.mxu0 0.0
        %299 = vmatprep.subr.mxu0 0.0
        %300 = vmatpush1.msra.mxu0 %v268
        %301 = vmatprep.subr.mxu0 0.0
        %302 = vmatpush1.msra.mxu0 %v267
        %303 = vmatprep.subr.mxu0 0.0
        %304 = vmatpush1.msra.mxu0 %v266
        %305 = vmatprep.subr.mxu0 0.0
        %306 = vmatpush1.msra.mxu0 %v265
        %307 = vmatprep.subr.mxu0 0.0
        %308 = vmatpush1.msra.mxu0 %v264
        %309 = vmatprep.subr.mxu0 0.0
        %310 = vmatpush1.msra.mxu0 %v263
        %311 = vmatprep.subr.mxu0 0.0
        %312 = vmatpush1.msra.mxu0 %v262
        %313 = vmatprep.subr.mxu0 0.0
        %314 = vmatpush1.msra.mxu0 %v261
        %315 = vmatprep.subr.mxu0 0.0
        %316 = vmatpush2.msra.mxu0 0.0
        %317 = vmatprep.subr.mxu0 0.0
        %318 = vmatpush2.msra.mxu0 0.0
        %319 = vmatprep.subr.mxu0 0.0
        %320 = vmatpush2.msra.mxu0 0.0
        %321 = vmatprep.subr.mxu0 0.0
        %322 = vmatpush2.msra.mxu0 0.0
        %323 = vmatprep.subr.mxu0 0.0
        %324 = vmatpush2.msra.mxu0 0.0
        %325 = vmatprep.subr.mxu0 0.0
        %326 = vmatpush2.msra.mxu0 0.0
        %327 = vmatprep.subr.mxu0 0.0
        %328 = vmatpush2.msra.mxu0 0.0
        %329 = vmatprep.subr.mxu0 0.0
        %330 = vmatpush2.msra.mxu0 0.0
        %331 = vmatprep.subr.mxu0 0.0
        %332 = vmatpush2.msra.mxu0 0.0
        %333 = vmatprep.subr.mxu0 0.0
        %334 = vmatpush2.msra.mxu0 0.0
        %335 = vmatprep.subr.mxu0 0.0
        %336 = vmatpush2.msra.mxu0 0.0
        %337 = vmatprep.subr.mxu0 0.0
        %338 = vmatpush2.msra.mxu0 0.0
        %339 = vmatprep.subr.mxu0 0.0
        %340 = vmatpush2.msra.mxu0 0.0
        %341 = vmatprep.subr.mxu0 0.0
        %342 = vmatpush2.msra.mxu0 0.0
        %343 = vmatprep.subr.mxu0 0.0
        %344 = vmatpush2.msra.mxu0 0.0
        %345 = vmatprep.subr.mxu0 0.0
        %346 = vmatpush2.msra.mxu0 0.0
        %347 = vmatprep.mubr.f32.mxu0 0.0
        %348 = vmatmul.mubr.f32.gmra.mxu0 %v278
        %v349 = vpop.f32.mrf.mxu0
        %v350 = vadd.f32 %v274, %v349
        %v351 = vpop.f32.mrf.mxu0
        %352 = vmatprep.mubr.f32.mxu0 0.0
        %353 = vmatmul.mubr.f32.gmra.mxu0 %v281
        %v354 = vpop.f32.mrf.mxu0
        %v355 = vadd.f32 %v274, %v354
        %v356 = vpop.f32.mrf.mxu0
        %357 = vdwg.mxu0
        %v358 = vmax.f32 %v350, 0.0
        %v359 = vmax.f32 %v355, 0.0
        %362 = vrot.lane.b32.xlu0 %v350, 64
        %v363 = vpop.permute.xlu0 %362
        %364 = vrot.lane.b32.xlu0 %v355, 64
        %v365 = vpop.permute.xlu0 %364
        %v368 = vmul.f32 %v358, %v363
        %v369 = vmul.f32 %v359, %v365
        %370 = vst.msk [vmem:[%s256] sm:$0xff] %vm276, %v368
        %371 = vst.msk [vmem:[%s256 + $0x8] sm:$0xff] %vm276, %v369
        %s372 = sand.u32 %s121, 1
        %s373 = scalar_lea.sflag [#allocation4], %s372
        %s374 = sand.u32 %s121, 1
        %s375 = smul.addr %s374, 16
        %s376 = scalar_lea.vmem [#allocation8], %s375
        // Predicated region
        $region45: #{mscffn_step1_pallas.1} parent=31 // pred_check
          %p377 = pneg %p131
        $region46: #{mscffn_step1_pallas.1} parent=31 // pred_check_branch
          %379 = sbr.rel (%p377) target = $region48
        $region47: #{mscffn_step1_pallas.1} parent=31 // pred_region
          %s380 = smul.u32 2, %s26
          %s382 = ssub.s32 256, 256
          %383 = vsyncadd %s373, %s382
          %s384 = smul.addr %s25, 2
          %s385 = sadd.s32 %s380, %s384
          %s386 = smul.addr %s385, 128
          %s387 = scalar_lea.hbm %s3, %s386
          %s388 = sshll.u32 %s376, 4
          %s389 = int_to_ptr.vmem [resolvable:$true] %s388
          %394 = dma.vmem_to_hbm [thread:$0]  %s389, 256, %s387, %s373, 128, 128, 8
        $region48: #{mscffn_step1_pallas.1} parent=31 // pred_fallthru
          _
      $region32: #{mscffn_step1_pallas.1} parent=5 // pred_fallthru
        _
      %p395 = scmp.le.s32.totalorder 2, %s16
      // Predicated region
      $region49: #{mscffn_step1_pallas.1} parent=5 // pred_check
        %p396 = pneg %p395
      $region50: #{mscffn_step1_pallas.1} parent=5 // pred_check_branch
        %398 = sbr.rel (%p396) target = $region52
      $region51: #{mscffn_step1_pallas.1} parent=5 // pred_region
        %s399 = ssub.s32 %s16, 2
        // Predicated region
        $region53: #{mscffn_step1_pallas.1} parent=51 // pred_check
          %p400 = pneg %p137
        $region54: #{mscffn_step1_pallas.1} parent=51 // pred_check_branch
          %402 = sbr.rel (%p400) target = $region56
        $region55: #{mscffn_step1_pallas.1} parent=51 // pred_region
          %s403 = sand.u32 %s122, 1
          %s404 = scalar_lea.sflag [#allocation4], %s403
          %s405 = sand.u32 %s122, 1
          %s406 = smul.addr %s405, 16
          %s407 = scalar_lea.vmem [#allocation8], %s406
          %408 = dma.done %s404, 256
        $region56: #{mscffn_step1_pallas.1} parent=51 // pred_fallthru
          _
      $region52: #{mscffn_step1_pallas.1} parent=5 // pred_fallthru
        _
    $region6: #{mscffn_step1_pallas.1} parent=1 // loop_footer
      %s20 = sadd.s32 1, %s16
    $region7: #{mscffn_step1_pallas.1} parent=1 // loop_footer_branch
      %15 = sbr.rel target = $region3
    $region8: #{mscffn_step1_pallas.1} parent=1 // loop_exit
      _
    %409 = vsyncpa [#allocation3], 1
    %s410 = scalar_lea.sflag [#allocation3], 1
    %411 = vsyncpa %s410, 1
    %412 = vsyncpa [#allocation6], 1
    %s413 = scalar_lea.sflag [#allocation6], 1
    %414 = vsyncpa %s413, 1
    %415 = vsyncpa [#allocation4], 1
    %s416 = scalar_lea.sflag [#allocation4], 1
    %417 = vsyncpa %s416, 1

</llo_original>
